<compile_context>
chip_gen: v6e
topology: v6e:2x2x1
jax: 0.10.0
libtpu: 0.0.40
codegen_flags: <defaults>
</compile_context>

<pallas_src>
import jax
import jax.numpy as jnp
from jax.experimental import pallas as pl
from jax.experimental.pallas import tpu as pltpu


def _repeat_kernel(x_ref, o_ref):
    # x_ref: (C, hw_t) input channel-slab chunk (read from HBM once).
    # o_ref: (r_t, C, hw_t) slot inside the (N, repeat, C, HW) output view.
    x = x_ref[...]
    for r in range(o_ref.shape[0]):          # r_t is static -> unrolled stores
        o_ref[r] = x


def _pick_hw_tile(hw: int, c: int, itemsize: int, cap_bytes: int) -> int:
    """Largest lane-dense chunk of HW (multiple of 128, or full HW) such that a
    (C, hw_t) block stays under cap_bytes per buffer."""
    if c * hw * itemsize <= cap_bytes:
        return hw
    if hw % 128 != 0:
        # Cannot split lane-densely; use the full (always-legal) extent.
        return hw
    t = hw
    while c * t * itemsize > cap_bytes and t % 2 == 0 and (t // 2) % 128 == 0:
        t //= 2
    return t


def _pick_repeat_tile(repeat: int, slab_bytes: int, cap_bytes: int) -> int:
    """Largest divisor r_t of `repeat` with r_t * slab_bytes <= cap_bytes."""
    best = 1
    for d in range(1, repeat + 1):
        if repeat % d == 0 and d * slab_bytes <= cap_bytes:
            best = d
    return best


def repeat_channel(img: jax.Array, repeat: int) -> jax.Array:
    """Pallas TPU implementation of RepeatChannel.forward (NCHW)."""
    N, C, H, W = img.shape
    HW = H * W
    itemsize = jnp.dtype(img.dtype).itemsize

    # ~2 MiB input blocks / ~8 MiB output blocks; double-buffered total ~20 MiB,
    # safe within the 32 MiB default scoped VMEM on all current generations.
    hw_t = _pick_hw_tile(HW, C, itemsize, cap_bytes=2 * 1024 * 1024)
    slab_bytes = C * hw_t * itemsize
    r_t = _pick_repeat_tile(repeat, slab_bytes, cap_bytes=8 * 1024 * 1024)

    s_tiles = pl.cdiv(HW, hw_t)        # hw_t divides HW by construction
    r_tiles = repeat // r_t            # r_t divides repeat by construction

    # Lane-dense view: flatten the spatial dims (free leading-dim collapse).
    x3 = img.reshape(N, C, HW)

    grid = (N, s_tiles, r_tiles)

    in_spec = pl.BlockSpec(
        (None, C, hw_t),                 # kernel sees (C, hw_t)
        lambda n, s, rb: (n, 0, s),      # independent of rb -> one HBM read
    )
    # Output is produced as a (N, repeat, C, HW) view, reshaped back afterwards.
    out_spec = pl.BlockSpec(
        (None, r_t, C, hw_t),            # kernel sees (r_t, C, hw_t)
        lambda n, s, rb: (n, rb, 0, s),
    )

    bytes_accessed = N * C * HW * itemsize * (1 + repeat)  # 1 read + repeat writes

    out4 = pl.pallas_call(
        _repeat_kernel,
        out_shape=jax.ShapeDtypeStruct((N, repeat, C, HW), img.dtype),
        grid=grid,
        in_specs=[in_spec],
        out_specs=out_spec,
        compiler_params=pltpu.CompilerParams(
            dimension_semantics=("parallel", "parallel", "parallel"),
        ),
        cost_estimate=pl.CostEstimate(
            flops=0, transcendentals=0, bytes_accessed=bytes_accessed
        ),
    )(x3)

    # (N, repeat, C, HW) -> (N, repeat*C, H, W): channel (r*C + c) == input c,
    # identical to torch img.repeat(1, repeat, 1, 1).
    return out4.reshape(N, repeat * C, H, W)


if __name__ == "__main__":
    key = jax.random.PRNGKey(0)
    N, C, H, W = 2, 4, 16, 16
    repeat = 3

    x = jax.random.normal(key, (N, C, H, W), dtype=jnp.float32)

    out = repeat_channel(x, repeat)
    out = jax.block_until_ready(out)

    # Reference: same semantics as torch img.repeat(1, repeat, 1, 1)
    ref = jnp.tile(x, (1, repeat, 1, 1))

    assert out.shape == (N, C * repeat, H, W), out.shape
    assert out.dtype == x.dtype
    assert jnp.array_equal(out, ref), "Mismatch vs reference tile"

    print("KERNEL_OK")
</pallas_src>

<mosaic_0001>
module attributes {stable_mosaic.version = 11 : i64} {
  func.func @_repeat_kernel(%arg0: i32, %arg1: i32, %arg2: i32, %arg3: memref<1x4x256xf32, #tpu.memory_space<vmem>>, %arg4: memref<1x3x4x256xf32, #tpu.memory_space<vmem>>) attributes {dimension_semantics = [#tpu.dimension_semantics<parallel>, #tpu.dimension_semantics<parallel>, #tpu.dimension_semantics<parallel>], iteration_bounds = array<i64: 2, 1, 1>, scalar_prefetch = 0 : i64, scratch_operands = 0 : i64, tpu.core_type = #tpu.core_type<tc>, window_params = [{transform_indices = @transform_0, window_bounds = array<i64: 1, 4, 256>}, {transform_indices = @transform_1, window_bounds = array<i64: 1, 3, 4, 256>}]} {
    %c0 = arith.constant 0 : index
    %c0_0 = arith.constant 0 : index
    %c0_1 = arith.constant 0 : index
    %0 = vector.load %arg3[%c0, %c0_0, %c0_1] : memref<1x4x256xf32, #tpu.memory_space<vmem>>, vector<1x4x256xf32>
    %1 = vector.shape_cast %0 : vector<1x4x256xf32> to vector<4x256xf32>
    %c0_2 = arith.constant 0 : index
    %c0_3 = arith.constant 0 : index
    %c0_4 = arith.constant 0 : index
    %c0_5 = arith.constant 0 : index
    %2 = vector.load %arg4[%c0_2, %c0_3, %c0_4, %c0_5] : memref<1x3x4x256xf32, #tpu.memory_space<vmem>>, vector<1x1x4x256xf32>
    %3 = vector.shape_cast %2 : vector<1x1x4x256xf32> to vector<4x256xf32>
    %4 = vector.shape_cast %1 : vector<4x256xf32> to vector<1x1x4x256xf32>
    tpu.vector_store %arg4[%c0_2, %c0_3, %c0_4, %c0_5], %4 {strides = array<i32>} : memref<1x3x4x256xf32, #tpu.memory_space<vmem>>, vector<1x1x4x256xf32>,
    %c0_6 = arith.constant 0 : index
    %c1 = arith.constant 1 : index
    %c0_7 = arith.constant 0 : index
    %c0_8 = arith.constant 0 : index
    %5 = vector.load %arg4[%c0_6, %c1, %c0_7, %c0_8] : memref<1x3x4x256xf32, #tpu.memory_space<vmem>>, vector<1x1x4x256xf32>
    %6 = vector.shape_cast %5 : vector<1x1x4x256xf32> to vector<4x256xf32>
    %7 = vector.shape_cast %1 : vector<4x256xf32> to vector<1x1x4x256xf32>
    tpu.vector_store %arg4[%c0_6, %c1, %c0_7, %c0_8], %7 {strides = array<i32>} : memref<1x3x4x256xf32, #tpu.memory_space<vmem>>, vector<1x1x4x256xf32>,
    %c0_9 = arith.constant 0 : index
    %c2 = arith.constant 2 : index
    %c0_10 = arith.constant 0 : index
    %c0_11 = arith.constant 0 : index
    %8 = vector.load %arg4[%c0_9, %c2, %c0_10, %c0_11] : memref<1x3x4x256xf32, #tpu.memory_space<vmem>>, vector<1x1x4x256xf32>
    %9 = vector.shape_cast %8 : vector<1x1x4x256xf32> to vector<4x256xf32>
    %10 = vector.shape_cast %1 : vector<4x256xf32> to vector<1x1x4x256xf32>
    tpu.vector_store %arg4[%c0_9, %c2, %c0_10, %c0_11], %10 {strides = array<i32>} : memref<1x3x4x256xf32, #tpu.memory_space<vmem>>, vector<1x1x4x256xf32>,
    return
  }
  func.func @transform_0(%arg0: i32, %arg1: i32, %arg2: i32) -> (i32, i32, i32) {
    %c0_i32 = arith.constant 0 : i32
    %c0_i32_0 = arith.constant 0 : i32
    return %arg0, %c0_i32, %arg1 : i32, i32, i32
  }
  func.func @transform_1(%arg0: i32, %arg1: i32, %arg2: i32) -> (i32, i32, i32, i32) {
    %c0_i32 = arith.constant 0 : i32
    %c0_i32_0 = arith.constant 0 : i32
    return %arg0, %arg2, %c0_i32, %arg1 : i32, i32, i32, i32
  }
}

</mosaic_0001>

<llo_original>
// kernel: tpu_custom_call.1
$region0: #{tpu_custom_call.1}
  #allocation0 [shape = 'u32[]', space=smem, size = 0x4, offset = 0x4, fixed_abs, tag = 'smem constant byte address 0x4 - core index']
  #allocation1 [shape = 'u32[144,128]{1,0:T(1,128)}', space=vmem, size = 0x12000, scoped, tag = 'internal scratch']
  %s0 = inlined_call_operand.hbm [shape: f32[2,4,256], index: 0, kind: input, shape index: {}]
  %s1 = inlined_call_operand.hbm [shape: f32[2,3,4,256], index: 1, kind: output, shape index: {}]
  %s2 = sld [smem:[#allocation0]]
  $region41: #{tpu_custom_call.1} parent=0
    _
  %s4 = ssub.s32 1, %s2
  %s5 = scalar_select 0, %s4, %s2
  $region1: #{tpu_custom_call.1} parent=0
    #allocation2 [shape = 'u8[8192]{0}', space=vmem, size = 0x2000, scoped, tag = 'input window, operand 0']
    #allocation3 [shape = 's32[2]{0}', space=sflag, size = 0x8, scoped, tag = 'scoped memory for tpu_custom_call.1']
    #allocation4 [shape = 's32[2]{0}', space=sflag, size = 0x8, scoped, tag = 'scoped memory for tpu_custom_call.1']
    #allocation5 [shape = 'u8[24576]{0}', space=vmem, size = 0x6000, scoped, tag = 'output window, operand 0']
    %6 = vsyncpa [#allocation3], 0
    %s7 = scalar_lea.sflag [#allocation3], 1
    %8 = vsyncpa %s7, 0
    %9 = vsyncpa [#allocation4], 0
    %s10 = scalar_lea.sflag [#allocation4], 1
    %11 = vsyncpa %s10, 0
    loop: start=0, step=1, limit=4
    $region2: #{tpu_custom_call.1} parent=1 // loop_pre_header
      _
    $region3: #{tpu_custom_call.1} parent=1 // loop_header
      %s13 = sphi 0, %s17
      %p14 = scmp.ge.s32.totalorder %s13, 4
      %s20 = sphi 0, %s39
      %s21 = sphi 0, %s35
      %s22 = sphi 0, %s31
      %s23 = sphi 0, %s20
      %s24 = sphi 0, %s21
      %s25 = sphi 0, %s22
      %s26 = sphi 0, %s23
      %s27 = sphi 0, %s24
      %s28 = sphi 0, %s25
      %s44 = sphi 0, %s46
      %s47 = sphi 0, %s44
      %s48 = sphi 0, %s47
      %s64 = sphi 0, %s48
      %s74 = sphi 0, %s76
      %s77 = sphi 0, %s74
      %s78 = sphi 0, %s77
      %s94 = sphi 0, %s78
    $region4: #{tpu_custom_call.1} parent=1 // loop_header_branch
      %16 = sbr.rel (%p14) target = $region8
    $region5: #{tpu_custom_call.1} parent=1 // loop_body
      %s18 = ssub.s32 %s13, 1
      %s19 = ssub.s32 %s13, 2
      %s29 = sadd.s32 1, %s22
      %p30 = scmp.ge.s32.totalorder %s29, 1
      %s31 = scalar_select %p30, 0, %s29
      %s32 = sadd.s32 1, %s21
      %s33 = scalar_select %p30, %s32, %s21
      %p34 = scmp.ge.s32.totalorder %s33, 1
      %s35 = scalar_select %p34, 0, %s33
      %s36 = sadd.s32 1, %s20
      %s37 = scalar_select %p34, %s36, %s20
      %p38 = scmp.ge.s32.totalorder %s37, 2
      %s39 = scalar_select %p38, 0, %s37
      %s40 = ssub.s32 %s20, %s39
      %s41 = ssub.s32 %s21, %s35
      %s42 = sor.u32 %s40, %s41
      %p43 = scmp.eq.s32.totalorder %s42, 0
      %s45 = sadd.s32 %s44, 1
      %s46 = scalar_select %p43, %s44, %s45
      %p49 = pneg %p43
      %p50 = scmp.eq.s32.totalorder %s13, 1
      %p51 = por %p49, %p50
      %p52 = scmp.ne.s32.totalorder %s44, %s47
      %p53 = scmp.eq.s32.totalorder %s13, 0
      %p54 = por %p52, %p53
      %p55 = scmp.ne.s32.totalorder %s44, %s47
      %p56 = scmp.eq.s32.totalorder %s18, 1
      %p57 = por %p55, %p56
      %p58 = scmp.ne.s32.totalorder %s47, %s48
      %p59 = scmp.eq.s32.totalorder %s18, 0
      %p60 = por %p58, %p59
      %p61 = scmp.ne.s32.totalorder %s47, %s48
      %p62 = scmp.eq.s32.totalorder %s19, 1
      %p63 = por %p61, %p62
      %p65 = scmp.ne.s32.totalorder %s48, %s64
      %p66 = scmp.eq.s32.totalorder %s19, 0
      %p67 = por %p65, %p66
      %s68 = ssub.s32 %s20, %s39
      %s69 = ssub.s32 %s22, %s31
      %s70 = sor.u32 %s68, %s69
      %s71 = ssub.s32 %s21, %s35
      %s72 = sor.u32 %s70, %s71
      %p73 = scmp.eq.s32.totalorder %s72, 0
      %s75 = sadd.s32 %s74, 1
      %s76 = scalar_select %p73, %s74, %s75
      %p79 = pneg %p73
      %p80 = scmp.eq.s32.totalorder %s13, 1
      %p81 = por %p79, %p80
      %p82 = scmp.ne.s32.totalorder %s74, %s77
      %p83 = scmp.eq.s32.totalorder %s13, 0
      %p84 = por %p82, %p83
      %p85 = scmp.ne.s32.totalorder %s74, %s77
      %p86 = scmp.eq.s32.totalorder %s18, 1
      %p87 = por %p85, %p86
      %p88 = scmp.ne.s32.totalorder %s77, %s78
      %p89 = scmp.eq.s32.totalorder %s18, 0
      %p90 = por %p88, %p89
      %p91 = scmp.ne.s32.totalorder %s77, %s78
      %p92 = scmp.eq.s32.totalorder %s19, 1
      %p93 = por %p91, %p92
      %p95 = scmp.ne.s32.totalorder %s78, %s94
      %p96 = scmp.eq.s32.totalorder %s19, 0
      %p97 = por %p95, %p96
      %p98 = scmp.le.s32.totalorder 1, %s13
      %p99 = scmp.lt.s32.totalorder %s13, 3
      %p100 = pnand %p98, %p99
      %p101 = pneg %p100
      // Predicated region
      $region9: #{tpu_custom_call.1} parent=5 // pred_check
        _
      $region10: #{tpu_custom_call.1} parent=5 // pred_check_branch
        %103 = sbr.rel (%p100) target = $region12
      $region11: #{tpu_custom_call.1} parent=5 // pred_region
        %s104 = ssub.s32 %s13, 1
      $region12: #{tpu_custom_call.1} parent=5 // pred_fallthru
        _
      %p105 = scmp.lt.s32.totalorder %s13, 2
      // Predicated region
      $region13: #{tpu_custom_call.1} parent=5 // pred_check
        %p106 = pneg %p105
      $region14: #{tpu_custom_call.1} parent=5 // pred_check_branch
        %108 = sbr.rel (%p106) target = $region16
      $region15: #{tpu_custom_call.1} parent=5 // pred_region
        // Predicated region
        $region17: #{tpu_custom_call.1} parent=15 // pred_check
          %p109 = pneg %p54
        $region18: #{tpu_custom_call.1} parent=15 // pred_check_branch
          %111 = sbr.rel (%p109) target = $region20
        $region19: #{tpu_custom_call.1} parent=15 // pred_region
          %s112 = sand.u32 %s44, 1
          %s113 = scalar_lea.sflag [#allocation3], %s112
          %s114 = sand.u32 %s44, 1
          %s115 = smul.addr %s114, 8
          %s116 = scalar_lea.vmem [#allocation2], %s115
          %s117 = smul.u32 2, %s21
          %s119 = ssub.s32 128, 128
          %120 = vsyncadd %s113, %s119
          %s121 = smul.addr %s20, 2
          %s122 = sadd.s32 %s117, %s121
          %s123 = smul.addr %s122, 64
          %s124 = scalar_lea.hbm %s0, %s123
          %s126 = sshll.u32 %s116, 4
          %s127 = int_to_ptr.vmem [resolvable:$true] %s126
          %129 = dma.hbm_to_vmem [thread:$0]  %s124, 128, %s127, %s113
        $region20: #{tpu_custom_call.1} parent=15 // pred_fallthru
          _
      $region16: #{tpu_custom_call.1} parent=5 // pred_fallthru
        _
      %p130 = scmp.le.s32.totalorder 1, %s13
      %p131 = scmp.lt.s32.totalorder %s13, 3
      %p132 = pnand %p130, %p131
      %p133 = pneg %p132
      // Predicated region
      $region21: #{tpu_custom_call.1} parent=5 // pred_check
        _
      $region22: #{tpu_custom_call.1} parent=5 // pred_check_branch
        %135 = sbr.rel (%p132) target = $region24
      $region23: #{tpu_custom_call.1} parent=5 // pred_region
        %s136 = ssub.s32 %s13, 1
        %s137 = sand.u32 %s47, 1
        %s138 = scalar_lea.sflag [#allocation3], %s137
        %s139 = sand.u32 %s47, 1
        %s140 = smul.addr %s139, 8
        %s141 = scalar_lea.vmem [#allocation2], %s140
        // Predicated region
        $region25: #{tpu_custom_call.1} parent=23 // pred_check
          %p142 = pneg %p60
        $region26: #{tpu_custom_call.1} parent=23 // pred_check_branch
          %144 = sbr.rel (%p142) target = $region28
        $region27: #{tpu_custom_call.1} parent=23 // pred_region
          %145 = dma.done %s138, 128
        $region28: #{tpu_custom_call.1} parent=23 // pred_fallthru
          _
        %s146 = sand.u32 %s47, 1
        %s147 = scalar_lea.sflag [#allocation3], %s146
        %s148 = sand.u32 %s47, 1
        %s149 = smul.addr %s148, 8
        %s150 = scalar_lea.vmem [#allocation2], %s149
        %p151 = pneg %p60
        %p152 = pneg %p57
        %p153 = pneg %p90
        %p154 = pneg %p87
        %s155 = sand.u32 %s77, 1
        %s156 = scalar_lea.sflag [#allocation4], %s155
        %s157 = sand.u32 %s77, 1
        %s158 = smul.addr %s157, 24
        %s159 = scalar_lea.vmem [#allocation5], %s158
        %s160 = smul.u32 2, %s24
        %s161 = smul.u32 3, %s25
        %s162 = smul.u32 2, %s24
        %v163 = vld [vmem:[%s141] sm:$0xff]
        %164 = vst [vmem:[%s159] sm:$0xff] %v163
        %s165 = scalar_lea.vmem %s159, 8 [#allocation5]
        %166 = vst [vmem:[%s165] sm:$0xff] %v163
        %s167 = scalar_lea.vmem %s159, 16 [#allocation5]
        %168 = vst [vmem:[%s167] sm:$0xff] %v163
        %s169 = sand.u32 %s77, 1
        %s170 = scalar_lea.sflag [#allocation4], %s169
        %s171 = sand.u32 %s77, 1
        %s172 = smul.addr %s171, 24
        %s173 = scalar_lea.vmem [#allocation5], %s172
        // Predicated region
        $region29: #{tpu_custom_call.1} parent=23 // pred_check
          %p174 = pneg %p87
        $region30: #{tpu_custom_call.1} parent=23 // pred_check_branch
          %176 = sbr.rel (%p174) target = $region32
        $region31: #{tpu_custom_call.1} parent=23 // pred_region
          %s177 = smul.u32 3, %s25
          %s178 = smul.u32 2, %s24
          %s180 = ssub.s32 384, 384
          %181 = vsyncadd %s170, %s180
          %s182 = smul.addr %s177, 2
          %s183 = sadd.s32 %s178, %s182
          %s184 = smul.addr %s23, 6
          %s185 = sadd.s32 %s183, %s184
          %s186 = smul.addr %s185, 64
          %s187 = scalar_lea.hbm %s1, %s186
          %s188 = sshll.u32 %s173, 4
          %s189 = int_to_ptr.vmem [resolvable:$true] %s188
          %194 = dma.vmem_to_hbm [thread:$0]  %s189, 384, %s187, %s170, 128, 128, 8
        $region32: #{tpu_custom_call.1} parent=23 // pred_fallthru
          _
      $region24: #{tpu_custom_call.1} parent=5 // pred_fallthru
        _
      %p195 = scmp.le.s32.totalorder 2, %s13
      // Predicated region
      $region33: #{tpu_custom_call.1} parent=5 // pred_check
        %p196 = pneg %p195
      $region34: #{tpu_custom_call.1} parent=5 // pred_check_branch
        %198 = sbr.rel (%p196) target = $region36
      $region35: #{tpu_custom_call.1} parent=5 // pred_region
        %s199 = ssub.s32 %s13, 2
        // Predicated region
        $region37: #{tpu_custom_call.1} parent=35 // pred_check
          %p200 = pneg %p93
        $region38: #{tpu_custom_call.1} parent=35 // pred_check_branch
          %202 = sbr.rel (%p200) target = $region40
        $region39: #{tpu_custom_call.1} parent=35 // pred_region
          %s203 = sand.u32 %s78, 1
          %s204 = scalar_lea.sflag [#allocation4], %s203
          %s205 = sand.u32 %s78, 1
          %s206 = smul.addr %s205, 24
          %s207 = scalar_lea.vmem [#allocation5], %s206
          %208 = dma.done %s204, 384
        $region40: #{tpu_custom_call.1} parent=35 // pred_fallthru
          _
      $region36: #{tpu_custom_call.1} parent=5 // pred_fallthru
        _
    $region6: #{tpu_custom_call.1} parent=1 // loop_footer
      %s17 = sadd.s32 1, %s13
    $region7: #{tpu_custom_call.1} parent=1 // loop_footer_branch
      %12 = sbr.rel target = $region3
    $region8: #{tpu_custom_call.1} parent=1 // loop_exit
      _
    %209 = vsyncpa [#allocation3], 1
    %s210 = scalar_lea.sflag [#allocation3], 1
    %211 = vsyncpa %s210, 1
    %212 = vsyncpa [#allocation4], 1
    %s213 = scalar_lea.sflag [#allocation4], 1
    %214 = vsyncpa %s213, 1

</llo_original>
